<compile_context>
chip_gen: v7x
topology: tpu7x:2x2x1
jax: 0.10.0
libtpu: 0.0.40
codegen_flags: <defaults>
</compile_context>

<pallas_src>
import functools

import jax
import jax.numpy as jnp
from jax import lax
from jax.experimental import pallas as pl
from jax.experimental.pallas import tpu as pltpu


def upsample1d_kernel(x_ref, w_ref, b_ref, mprev_ref, mnext_ref, o_ref, *, C):
    x = x_ref[...]                                    # (C, N) f32, N = B*L
    N = x.shape[1]

    # Length shifts along the flattened (batch*length) lane axis via XLU rolls.
    # Circular wrap columns are exactly the batch-boundary columns, which the
    # precomputed masks zero out.
    x_prev = pltpu.roll(x, 1, axis=1) * mprev_ref[...]       # x[:, n-1], 0 at n % L == 0
    x_next = pltpu.roll(x, N - 1, axis=1) * mnext_ref[...]   # x[:, n+1], 0 at n % L == L-1

    # Stacked input (3C, N) = [x_next; x; x_prev]; single fused MXU matmul with
    # the (2C, 3C) weight -> rows [0:C] = even stream, rows [C:2C] = odd stream.
    x3 = jnp.concatenate([x_next, x, x_prev], axis=0).astype(jnp.bfloat16)
    y = jnp.dot(w_ref[...], x3, preferred_element_type=jnp.float32)   # (2C, N) f32

    bias = jnp.broadcast_to(b_ref[...], (C, N))       # hoisted: one lane broadcast
    o_ref[0] = (y[0:C, :] + bias).astype(o_ref.dtype)       # even outputs (2m)
    o_ref[1] = (y[C:2 * C, :] + bias).astype(o_ref.dtype)   # odd outputs  (2m+1)


def upsample1d(x, w, b):
    """ConvTranspose1d(C, C, kernel=4, stride=2, padding=1): (B,C,L) -> (B,C,2L)."""
    B, C, L = x.shape
    N = B * L
    # Layout assumptions for the lane-dense slab / aligned sublane slices.
    assert N % 128 == 0, f"B*L must be a multiple of 128, got {N}"
    assert C % 8 == 0, f"C must be a multiple of 8, got {C}"

    # Channel-major, lane-dense input slab: column index n = b*L + m.
    x2 = jnp.transpose(x, (1, 0, 2)).reshape(C, N)

    # Fused (2C, 3C) weight.  Column blocks correspond to [x_next; x; x_prev]:
    #   even rows: [0, w[...,1]^T, w[...,3]^T]   odd rows: [w[...,0]^T, w[...,2]^T, 0]
    wt = jnp.transpose(w, (1, 0, 2))                  # (co, ci, k)
    zeros = jnp.zeros((C, C), w.dtype)
    w_even = jnp.concatenate([zeros, wt[..., 1], wt[..., 3]], axis=1)   # (C, 3C)
    w_odd = jnp.concatenate([wt[..., 0], wt[..., 2], zeros], axis=1)    # (C, 3C)
    w2 = jnp.concatenate([w_even, w_odd], axis=0).astype(jnp.bfloat16)  # (2C, 3C)

    b2 = b.reshape(C, 1).astype(jnp.float32)

    # Precomputed batch-boundary masks (zero the wrapped/missing neighbor columns).
    n_idx = jnp.arange(N)
    mprev = (n_idx % L != 0).astype(jnp.float32).reshape(1, N)      # kill n-1 at batch starts
    mnext = (n_idx % L != L - 1).astype(jnp.float32).reshape(1, N)  # kill n+1 at batch ends

    kernel = functools.partial(upsample1d_kernel, C=C)
    out = pl.pallas_call(
        kernel,
        out_shape=jax.ShapeDtypeStruct((2, C, N), x.dtype),
        in_specs=[
            pl.BlockSpec(memory_space=pltpu.MemorySpace.VMEM),   # x slab (C, N)
            pl.BlockSpec(memory_space=pltpu.MemorySpace.VMEM),   # fused weight (2C, 3C) bf16
            pl.BlockSpec(memory_space=pltpu.MemorySpace.VMEM),   # bias (C, 1)
            pl.BlockSpec(memory_space=pltpu.MemorySpace.VMEM),   # prev-shift mask (1, N)
            pl.BlockSpec(memory_space=pltpu.MemorySpace.VMEM),   # next-shift mask (1, N)
        ],
        out_specs=pl.BlockSpec(memory_space=pltpu.MemorySpace.VMEM),
    )(x2, w2, b2, mprev, mnext)

    # (2, C, B, L) -> (B, C, L, 2) -> (B, C, 2L): interleave even/odd streams.
    return out.reshape(2, C, B, L).transpose(2, 1, 3, 0).reshape(B, C, 2 * L)


def reference(x, w, b):
    """Pure-JAX ConvTranspose1d(C, C, 4, 2, 1) via dilated conv (independent path)."""
    # conv_transpose(x, w; s=2, p=1) == conv(dilate_2(x), flip(w^T); pad = k-1-p = 2)
    w_conv = jnp.flip(jnp.transpose(w, (1, 0, 2)), axis=2)     # (O, I, K)
    out = lax.conv_general_dilated(
        x, w_conv, window_strides=(1,), padding=[(2, 2)],
        lhs_dilation=(2,), rhs_dilation=(1,),
        dimension_numbers=("NCH", "OIH", "NCH"),
        precision=lax.Precision.HIGHEST)
    return out + b[None, :, None]


if __name__ == "__main__":
    # Small but lane-friendly shapes: B*L = 128 (full lane width), output len 2L = 128.
    B, C, L = 2, 32, 64
    key = jax.random.PRNGKey(0)
    kx, kw, kb = jax.random.split(key, 3)
    x = jax.random.normal(kx, (B, C, L), jnp.float32)
    w = jax.random.normal(kw, (C, C, 4), jnp.float32) * 0.05   # ConvTranspose1d.weight (Cin, Cout, K)
    b = jax.random.normal(kb, (C,), jnp.float32) * 0.05        # ConvTranspose1d.bias

    out = upsample1d(x, w, b)
    out = jax.block_until_ready(out)

    ref = reference(x, w, b)
    assert out.shape == (B, C, 2 * L), out.shape
    err = jnp.max(jnp.abs(out - ref))
    assert jnp.allclose(out, ref, atol=1e-2, rtol=1e-2), f"max abs err {err}"
    print("KERNEL_OK")
</pallas_src>

<mosaic_0001>
module attributes {stable_mosaic.version = 11 : i64} {
  func.func @upsample1d_kernel(%arg0: memref<32x128xf32, #tpu.memory_space<vmem>>, %arg1: memref<64x96xbf16, #tpu.memory_space<vmem>>, %arg2: memref<32x1xf32, #tpu.memory_space<vmem>>, %arg3: memref<1x128xf32, #tpu.memory_space<vmem>>, %arg4: memref<1x128xf32, #tpu.memory_space<vmem>>, %arg5: memref<2x32x128xf32, #tpu.memory_space<vmem>>) attributes {dimension_semantics = [], scalar_prefetch = 0 : i64, scratch_operands = 0 : i64, tpu.core_type = #tpu.core_type<tc>} {
    %c0 = arith.constant 0 : index
    %c0_0 = arith.constant 0 : index
    %0 = vector.load %arg0[%c0, %c0_0] : memref<32x128xf32, #tpu.memory_space<vmem>>, vector<32x128xf32>
    %c1_i32 = arith.constant 1 : i32
    %1 = tpu.dynamic_rotate %0 by %c1_i32 dim 1 : vector<32x128xf32>, i32 -> vector<32x128xf32>
    %c0_1 = arith.constant 0 : index
    %c0_2 = arith.constant 0 : index
    %2 = vector.load %arg3[%c0_1, %c0_2] : memref<1x128xf32, #tpu.memory_space<vmem>>, vector<1x128xf32>
    %3 = vector.broadcast %2 : vector<1x128xf32> to vector<32x128xf32>
    %4 = arith.mulf %1, %3 : vector<32x128xf32>
    %c127_i32 = arith.constant 127 : i32
    %5 = tpu.dynamic_rotate %0 by %c127_i32 dim 1 : vector<32x128xf32>, i32 -> vector<32x128xf32>
    %c0_3 = arith.constant 0 : index
    %c0_4 = arith.constant 0 : index
    %6 = vector.load %arg4[%c0_3, %c0_4] : memref<1x128xf32, #tpu.memory_space<vmem>>, vector<1x128xf32>
    %7 = vector.broadcast %6 : vector<1x128xf32> to vector<32x128xf32>
    %8 = arith.mulf %5, %7 : vector<32x128xf32>
    %9 = tpu.concatenate %8, %0, %4 in 0 : vector<32x128xf32>, vector<32x128xf32>, vector<32x128xf32> -> vector<96x128xf32>
    %10 = arith.truncf %9 : vector<96x128xf32> to vector<96x128xbf16>
    %c0_5 = arith.constant 0 : index
    %c0_6 = arith.constant 0 : index
    %11 = vector.load %arg1[%c0_5, %c0_6] : memref<64x96xbf16, #tpu.memory_space<vmem>>, vector<64x96xbf16>
    %cst = arith.constant dense<0.000000e+00> : vector<64x128xf32>
    %12 = tpu.matmul %11, %10, %cst {dimension_numbers = #tpu.dot_dimension_numbers<[1], [0], [0], [1], [0, 0, 1, 1], [], []>} : vector<64x96xbf16>, vector<96x128xbf16>, vector<64x128xf32> -> vector<64x128xf32>
    %c0_7 = arith.constant 0 : index
    %c0_8 = arith.constant 0 : index
    %13 = vector.load %arg2[%c0_7, %c0_8] : memref<32x1xf32, #tpu.memory_space<vmem>>, vector<32x1xf32>
    %14 = vector.shape_cast %13 : vector<32x1xf32> to vector<32x1xf32>
    %15 = vector.broadcast %14 : vector<32x1xf32> to vector<32x128xf32>
    %16 = vector.extract_strided_slice %12 {offsets = [0, 0], sizes = [32, 128], strides = [1, 1]} : vector<64x128xf32> to vector<32x128xf32>
    %17 = arith.addf %16, %15 : vector<32x128xf32>
    %c0_9 = arith.constant 0 : index
    %c0_10 = arith.constant 0 : index
    %c0_11 = arith.constant 0 : index
    %18 = vector.load %arg5[%c0_9, %c0_10, %c0_11] : memref<2x32x128xf32, #tpu.memory_space<vmem>>, vector<1x32x128xf32>
    %19 = vector.shape_cast %18 : vector<1x32x128xf32> to vector<32x128xf32>
    %20 = vector.shape_cast %17 : vector<32x128xf32> to vector<1x32x128xf32>
    tpu.vector_store %arg5[%c0_9, %c0_10, %c0_11], %20 {strides = array<i32>} : memref<2x32x128xf32, #tpu.memory_space<vmem>>, vector<1x32x128xf32>,
    %21 = vector.extract_strided_slice %12 {offsets = [32, 0], sizes = [32, 128], strides = [1, 1]} : vector<64x128xf32> to vector<32x128xf32>
    %22 = arith.addf %21, %15 : vector<32x128xf32>
    %c1 = arith.constant 1 : index
    %c0_12 = arith.constant 0 : index
    %c0_13 = arith.constant 0 : index
    %23 = vector.load %arg5[%c1, %c0_12, %c0_13] : memref<2x32x128xf32, #tpu.memory_space<vmem>>, vector<1x32x128xf32>
    %24 = vector.shape_cast %23 : vector<1x32x128xf32> to vector<32x128xf32>
    %25 = vector.shape_cast %22 : vector<32x128xf32> to vector<1x32x128xf32>
    tpu.vector_store %arg5[%c1, %c0_12, %c0_13], %25 {strides = array<i32>} : memref<2x32x128xf32, #tpu.memory_space<vmem>>, vector<1x32x128xf32>,
    return
  }
}

</mosaic_0001>

<llo_original>
// kernel: tpu_custom_call.1
$region0: #{tpu_custom_call.1}
  #allocation0 [shape = 'u32[]', space=smem, size = 0x4, offset = 0x4, fixed_abs, tag = 'smem constant byte address 0x4 - core index']
  #allocation1 [shape = 'u32[144,128]{1,0:T(1,128)}', space=vmem, size = 0x12000, scoped, tag = 'internal scratch']
  %s0 = inlined_call_operand.vmem [shape: f32[32,128], index: 0, kind: input, shape index: {}]
  %s1 = inlined_call_operand.hbm [shape: bf16[64,96], index: 1, kind: input, shape index: {}]
  %s2 = inlined_call_operand.vmem [shape: f32[32,1], index: 2, kind: input, shape index: {}]
  %s3 = inlined_call_operand.vmem [shape: f32[1,128], index: 3, kind: input, shape index: {}]
  %s4 = inlined_call_operand.vmem [shape: f32[1,128], index: 4, kind: input, shape index: {}]
  %s5 = inlined_call_operand.hbm [shape: f32[2,32,128], index: 5, kind: output, shape index: {}]
  %s6 = sld [smem:[#allocation0]]
  $region34: #{tpu_custom_call.1} parent=0
    _
  %s8 = ssub.s32 1, %s6
  %s9 = scalar_select 0, %s8, %s6
  $region1: #{tpu_custom_call.1} parent=0
    #allocation2 [shape = 'u8[16384]{0}', space=vmem, size = 0x4000, scoped, tag = 'input window, operand 1, single buffered']
    #allocation3 [shape = 's32[1]{0}', space=sflag, size = 0x4, scoped, tag = 'scoped memory for tpu_custom_call.1']
    #allocation4 [shape = 's32[1]{0}', space=sflag, size = 0x4, scoped, tag = 'scoped memory for tpu_custom_call.1']
    #allocation5 [shape = 'u8[32768]{0}', space=vmem, size = 0x8000, scoped, tag = 'output window, operand 0, single buffered']
    %10 = vsyncpa [#allocation3], 0
    %11 = vsyncpa [#allocation4], 0
    // Predicated region
    $region2: #{tpu_custom_call.1} parent=1 // pred_check
      _
    $region3: #{tpu_custom_call.1} parent=1 // pred_check_branch
      %13 = sbr.rel (0) target = $region5
    $region4: #{tpu_custom_call.1} parent=1 // pred_region
      _
    $region5: #{tpu_custom_call.1} parent=1 // pred_fallthru
      _
    // Predicated region
    $region6: #{tpu_custom_call.1} parent=1 // pred_check
      _
    $region7: #{tpu_custom_call.1} parent=1 // pred_check_branch
      %15 = sbr.rel (0) target = $region9
    $region8: #{tpu_custom_call.1} parent=1 // pred_region
      %s17 = ssub.s32 512, 512
      %18 = vsyncadd [#allocation3], %s17
      %s19 = sshll.u32 [#allocation2], 4
      %s20 = int_to_ptr.vmem [resolvable:$true] %s19
      %25 = dma.hbm_to_vmem [thread:$0]  %s1, 512, %s20, [#allocation3], 64, 64, 4
    $region9: #{tpu_custom_call.1} parent=1 // pred_fallthru
      _
    // Predicated region
    $region10: #{tpu_custom_call.1} parent=1 // pred_check
      _
    $region11: #{tpu_custom_call.1} parent=1 // pred_check_branch
      %27 = sbr.rel (0) target = $region13
    $region12: #{tpu_custom_call.1} parent=1 // pred_region
      _
    $region13: #{tpu_custom_call.1} parent=1 // pred_fallthru
      _
    // Predicated region
    $region14: #{tpu_custom_call.1} parent=1 // pred_check
      _
    $region15: #{tpu_custom_call.1} parent=1 // pred_check_branch
      %29 = sbr.rel (0) target = $region17
    $region16: #{tpu_custom_call.1} parent=1 // pred_region
      _
    $region17: #{tpu_custom_call.1} parent=1 // pred_fallthru
      _
    // Predicated region
    $region18: #{tpu_custom_call.1} parent=1 // pred_check
      _
    $region19: #{tpu_custom_call.1} parent=1 // pred_check_branch
      %31 = sbr.rel (0) target = $region21
    $region20: #{tpu_custom_call.1} parent=1 // pred_region
      _
    $region21: #{tpu_custom_call.1} parent=1 // pred_fallthru
      _
    // Predicated region
    $region22: #{tpu_custom_call.1} parent=1 // pred_check
      _
    $region23: #{tpu_custom_call.1} parent=1 // pred_check_branch
      %33 = sbr.rel (0) target = $region25
    $region24: #{tpu_custom_call.1} parent=1 // pred_region
      %34 = dma.done [#allocation3], 512
    $region25: #{tpu_custom_call.1} parent=1 // pred_fallthru
      _
    %v36 = vld [vmem:[%s0] sm:$0xff]
    %v37 = vld [vmem:[%s0 + $0x8] sm:$0xff]
    %v38 = vld [vmem:[%s0 + $0x10] sm:$0xff]
    %v39 = vld [vmem:[%s0 + $0x18] sm:$0xff]
    %40 = vrot.lane.b32.xlu0 %v36, 1
    %v41 = vpop.permute.xlu0 %40
    %42 = vrot.lane.b32.xlu0 %v37, 1
    %v43 = vpop.permute.xlu0 %42
    %44 = vrot.lane.b32.xlu0 %v38, 1
    %v45 = vpop.permute.xlu0 %44
    %46 = vrot.lane.b32.xlu0 %v39, 1
    %v47 = vpop.permute.xlu0 %46
    %v48 = vld [vmem:[%s3] sm:$0x1]
    %v50 = vlaneseq
    %v51 = vshrl.u32 %v50, 7
    %v52 = vsub.s32 0, %v51
    %v53 = vrot.slane %v48, %v52
    %v55 = vmul.f32 %v41, %v53
    %v56 = vmul.f32 %v43, %v53
    %v57 = vmul.f32 %v45, %v53
    %v58 = vmul.f32 %v47, %v53
    %59 = vrot.lane.b32.xlu0 %v36, 127
    %v60 = vpop.permute.xlu0 %59
    %61 = vrot.lane.b32.xlu0 %v37, 127
    %v62 = vpop.permute.xlu0 %61
    %63 = vrot.lane.b32.xlu0 %v38, 127
    %v64 = vpop.permute.xlu0 %63
    %65 = vrot.lane.b32.xlu0 %v39, 127
    %v66 = vpop.permute.xlu0 %65
    %v67 = vld [vmem:[%s4] sm:$0x1]
    %v69 = vlaneseq
    %v70 = vshrl.u32 %v69, 7
    %v71 = vsub.s32 0, %v70
    %v72 = vrot.slane %v67, %v71
    %v74 = vmul.f32 %v60, %v72
    %v75 = vmul.f32 %v62, %v72
    %v76 = vmul.f32 %v64, %v72
    %v77 = vmul.f32 %v66, %v72
    %v78 = vpack.c.bf16 %v75, %v74
    %v79 = vpack.c.bf16 %v77, %v76
    %v80 = vpack.c.bf16 %v37, %v36
    %v81 = vpack.c.bf16 %v39, %v38
    %v82 = vpack.c.bf16 %v56, %v55
    %v83 = vpack.c.bf16 %v58, %v57
    %v84 = vld [vmem:[#allocation2] sm:$0xf]
    %v85 = vld [vmem:[#allocation2 + $0x4] sm:$0xf]
    %v86 = vld [vmem:[#allocation2 + $0x8] sm:$0xf]
    %v87 = vld [vmem:[#allocation2 + $0xc] sm:$0xf]
    %v88 = vld [vmem:[#allocation2 + $0x10] sm:$0xf]
    %v89 = vld [vmem:[#allocation2 + $0x14] sm:$0xf]
    %v90 = vld [vmem:[#allocation2 + $0x18] sm:$0xf]
    %v91 = vld [vmem:[#allocation2 + $0x1c] sm:$0xf]
    %v100 = vunpack.c.l.b16 %v84
    %v101 = vunpack.c.l.b16 %v85
    %v102 = vunpack.c.l.b16 %v86
    %v103 = vunpack.c.l.b16 %v87
    %v104 = vunpack.c.l.b16 %v88
    %v105 = vunpack.c.l.b16 %v89
    %v106 = vunpack.c.l.b16 %v90
    %v107 = vunpack.c.l.b16 %v91
    %v108 = vpack.c.b16 %v101, %v100
    %v109 = vpack.c.b16 %v103, %v102
    %v110 = vpack.c.b16 %v105, %v104
    %v111 = vpack.c.b16 %v107, %v106
    %vm112 = vcmask 785408
    %v114 = vsel %vm112, %v108, 0
    %v117 = vsel %vm112, %v109, 0
    %v120 = vsel %vm112, %v110, 0
    %v123 = vsel %vm112, %v111, 0
    %125 = vmatprep.subr.bf16.mxu0 0
    %126 = vmatpush1.bf16.msra.mxu0 %v78
    %127 = vmatprep.subr.bf16.mxu0 0
    %128 = vmatpush1.bf16.msra.mxu0 %v79
    %129 = vmatprep.subr.bf16.mxu0 0
    %130 = vmatpush1.bf16.msra.mxu0 %v80
    %131 = vmatprep.subr.bf16.mxu0 0
    %132 = vmatpush1.bf16.msra.mxu0 %v81
    %133 = vmatprep.subr.bf16.mxu0 0
    %134 = vmatpush1.bf16.msra.mxu0 %v82
    %135 = vmatprep.subr.bf16.mxu0 0
    %136 = vmatpush1.bf16.msra.mxu0 %v83
    %137 = vmatprep.subr.bf16.mxu0 0
    %138 = vmatpush1.bf16.msra.mxu0 0
    %139 = vmatprep.subr.bf16.mxu0 0
    %140 = vmatpush1.bf16.msra.mxu0 0
    %141 = vmatprep.subr.bf16.mxu0 0
    %142 = vmatpush1.bf16.msra.mxu0 0
    %143 = vmatprep.subr.bf16.mxu0 0
    %144 = vmatpush1.bf16.msra.mxu0 0
    %145 = vmatprep.subr.bf16.mxu0 0
    %146 = vmatpush1.bf16.msra.mxu0 0
    %147 = vmatprep.subr.bf16.mxu0 0
    %148 = vmatpush1.bf16.msra.mxu0 0
    %149 = vmatprep.subr.bf16.mxu0 0
    %150 = vmatpush1.bf16.msra.mxu0 0
    %151 = vmatprep.subr.bf16.mxu0 0
    %152 = vmatpush1.bf16.msra.mxu0 0
    %153 = vmatprep.subr.bf16.mxu0 0
    %154 = vmatpush1.bf16.msra.mxu0 0
    %155 = vmatprep.subr.bf16.mxu0 0
    %156 = vmatpush1.bf16.msra.mxu0 0
    %157 = vmatprep.mubr.bf16.mxu0 0
    %158 = vmatmul.mubr.bf16.gmra.mrb[0].mxu0 %v114
    %v159 = vpop.f32.mrb[0].mxu0
    %v160 = vadd.f32 0.0, %v159
    %v161 = vpop.f32.mrb[0].mxu0
    %v162 = vpop.f32.mrb[0].mxu0
    %v163 = vadd.f32 0.0, %v162
    %v164 = vpop.f32.mrb[0].mxu0
    %165 = vmatprep.mubr.bf16.mxu0 0
    %166 = vmatmul.mubr.bf16.gmra.mrb[0].mxu0 %v117
    %v167 = vpop.f32.mrb[0].mxu0
    %v168 = vadd.f32 0.0, %v167
    %v169 = vpop.f32.mrb[0].mxu0
    %v170 = vpop.f32.mrb[0].mxu0
    %v171 = vadd.f32 0.0, %v170
    %v172 = vpop.f32.mrb[0].mxu0
    %173 = vmatprep.mubr.bf16.mxu0 0
    %174 = vmatmul.mubr.bf16.gmra.mrb[0].mxu0 %v120
    %v175 = vpop.f32.mrb[0].mxu0
    %v176 = vadd.f32 0.0, %v175
    %v177 = vpop.f32.mrb[0].mxu0
    %v178 = vpop.f32.mrb[0].mxu0
    %v179 = vadd.f32 0.0, %v178
    %v180 = vpop.f32.mrb[0].mxu0
    %181 = vmatprep.mubr.bf16.mxu0 0
    %182 = vmatmul.mubr.bf16.gmra.mrb[0].mxu0 %v123
    %v183 = vpop.f32.mrb[0].mxu0
    %v184 = vadd.f32 0.0, %v183
    %v185 = vpop.f32.mrb[0].mxu0
    %v186 = vpop.f32.mrb[0].mxu0
    %v187 = vadd.f32 0.0, %v186
    %v188 = vpop.f32.mrb[0].mxu0
    %189 = vdwg.mxu0
    %v190 = vld [vmem:[%s2] sm:$0xff]
    %v191 = vld [vmem:[%s2 + $0x8] sm:$0xff]
    %v192 = vld [vmem:[%s2 + $0x10] sm:$0xff]
    %v193 = vld [vmem:[%s2 + $0x18] sm:$0xff]
    %195 = vset.pattern.permute.xlu0 0
    %196 = vperm.xlu0 %195, %v190
    %v197 = vpop.permute.xlu0 %196
    %200 = vset.pattern.permute.xlu0 0
    %201 = vperm.xlu0 %200, %v191
    %v202 = vpop.permute.xlu0 %201
    %205 = vset.pattern.permute.xlu0 0
    %206 = vperm.xlu0 %205, %v192
    %v207 = vpop.permute.xlu0 %206
    %210 = vset.pattern.permute.xlu0 0
    %211 = vperm.xlu0 %210, %v193
    %v212 = vpop.permute.xlu0 %211
    %v214 = vadd.f32 %v160, %v197
    %v215 = vadd.f32 %v163, %v202
    %v216 = vadd.f32 %v168, %v207
    %v217 = vadd.f32 %v171, %v212
    %218 = vst [vmem:[#allocation5] sm:$0xff] %v214
    %219 = vst [vmem:[#allocation5 + $0x8] sm:$0xff] %v215
    %220 = vst [vmem:[#allocation5 + $0x10] sm:$0xff] %v216
    %221 = vst [vmem:[#allocation5 + $0x18] sm:$0xff] %v217
    %v222 = vadd.f32 %v176, %v197
    %v223 = vadd.f32 %v179, %v202
    %v224 = vadd.f32 %v184, %v207
    %v225 = vadd.f32 %v187, %v212
    %s226 = scalar_lea.vmem [#allocation5], 32
    %227 = vst [vmem:[%s226] sm:$0xff] %v222
    %228 = vst [vmem:[%s226 + $0x8] sm:$0xff] %v223
    %229 = vst [vmem:[%s226 + $0x10] sm:$0xff] %v224
    %230 = vst [vmem:[%s226 + $0x18] sm:$0xff] %v225
    // Predicated region
    $region26: #{tpu_custom_call.1} parent=1 // pred_check
      _
    $region27: #{tpu_custom_call.1} parent=1 // pred_check_branch
      %232 = sbr.rel (0) target = $region29
    $region28: #{tpu_custom_call.1} parent=1 // pred_region
      %s234 = ssub.s32 1024, 1024
      %235 = vsyncadd [#allocation4], %s234
      %s236 = sshll.u32 [#allocation5], 4
      %s237 = int_to_ptr.vmem [resolvable:$true] %s236
      %242 = dma.vmem_to_hbm [thread:$0]  %s237, 1024, %s5, [#allocation4], 128, 128, 8
    $region29: #{tpu_custom_call.1} parent=1 // pred_fallthru
      _
    // Predicated region
    $region30: #{tpu_custom_call.1} parent=1 // pred_check
      _
    $region31: #{tpu_custom_call.1} parent=1 // pred_check_branch
      %244 = sbr.rel (0) target = $region33
    $region32: #{tpu_custom_call.1} parent=1 // pred_region
      %245 = dma.done [#allocation4], 1024
    $region33: #{tpu_custom_call.1} parent=1 // pred_fallthru
      _
    %246 = vsyncpa [#allocation3], 1
    %247 = vsyncpa [#allocation4], 1

</llo_original>
